<compile_context>
chip_gen: v7x
topology: tpu7x:2x2x1
jax: 0.10.0
libtpu: 0.0.40
codegen_flags: <defaults>
</compile_context>

<pallas_src>
import functools

import jax
import jax.numpy as jnp
from jax.experimental import pallas as pl
from jax.experimental.pallas import tpu as pltpu


def _round_up(n, m):
    return (n + m - 1) // m * m


def _cdiv(a, b):
    return (a + b - 1) // b


def _lane_pad(n):
    """Pad a lane (last) dim to 128; bump to a 256 multiple when the extra
    padding is small (<~15%), since the v6e/v7x MXU is 256 wide."""
    n = max(int(n), 1)
    p128 = _round_up(n, 128)
    p256 = _round_up(n, 256)
    if p256 == p128 or (p256 - n) <= 0.15 * n:
        return p256
    return p128


def _vmem_capacity_bytes():
    try:
        info = pltpu.get_tpu_info()
        cap = int(getattr(info, "vmem_capacity_bytes", 0) or 0)
        if cap > 0:
            return cap
    except Exception:
        pass
    return 64 * 1024 * 1024  # conservative fallback (v7x per-core VMEM)


# ---------------- Pallas kernels ----------------

def _fc_expand_kernel(x_ref, w1_ref, b1_ref, w2_ref, b2_ref, o_ref, acc_ref,
                      *, cast_bf16):
    """grid = (batch_tiles, exp_tiles).  Axis 1 tiles the expand dim: it is the
    N dim of matmul-1 and the K (reduction) dim of matmul-2, accumulated into
    an fp32 VMEM scratch; init at j==0, bias+store at j==last."""
    j = pl.program_id(1)

    @pl.when(j == 0)
    def _():
        acc_ref[...] = jnp.zeros_like(acc_ref)

    x = x_ref[...]
    if cast_bf16:
        x = x.astype(jnp.bfloat16)  # in-kernel cast: no separate XLA cast pass
    # hidden tile = relu(x @ W1[:, j] + b1[j])   (fp32 MXU accumulate)
    h = jnp.dot(x, w1_ref[...], preferred_element_type=jnp.float32)
    h = jnp.maximum(h + b1_ref[...], 0.0)
    # partial out += hidden tile @ W2[j, :]
    acc_ref[...] += jnp.dot(h.astype(w2_ref.dtype), w2_ref[...],
                            preferred_element_type=jnp.float32)

    @pl.when(j == pl.num_programs(1) - 1)
    def _():
        o_ref[...] = (acc_ref[...] + b2_ref[...]).astype(o_ref.dtype)


def _fc_plain_kernel(x_ref, w_ref, b_ref, o_ref, *, cast_bf16):
    x = x_ref[...]
    if cast_bf16:
        x = x.astype(jnp.bfloat16)
    y = jnp.dot(x, w_ref[...], preferred_element_type=jnp.float32)
    o_ref[...] = (y + b_ref[...]).astype(o_ref.dtype)


# ---------------- Python wrapper (mirrors FC.forward) ----------------

class FCPallas:
    """JAX/Pallas equivalent of the PyTorch FC module.

    use_bf16=True (default perf mode) runs the matmuls with bf16 operands and
    fp32 accumulation; the ReLU hidden is also quantized to bf16 before the
    second matmul.  Pass use_bf16=False for exact fp32 PyTorch semantics.
    """

    def __init__(self, input_dim, output_dim, expand_dim, stddev=None, key=None,
                 use_bf16=True, max_exp_tile=None):
        self.input_dim = input_dim
        self.output_dim = output_dim
        self.expand_dim = expand_dim
        self.use_bf16 = use_bf16
        self.max_exp_tile = max_exp_tile  # testing/override hook for exp tiling
        mm_dtype = jnp.bfloat16 if use_bf16 else jnp.float32

        if key is None:
            key = jax.random.PRNGKey(0)
        k1, k2, k3, k4 = jax.random.split(key, 4)

        def _linear_init(kw, kb, fan_in, fan_out):
            # PyTorch nn.Linear default init: U(-1/sqrt(fan_in), 1/sqrt(fan_in))
            bound = 1.0 / float(fan_in) ** 0.5
            w = jax.random.uniform(kw, (fan_out, fan_in), jnp.float32, -bound, bound)
            b = jax.random.uniform(kb, (fan_out,), jnp.float32, -bound, bound)
            return w, b

        out_pad = _lane_pad(output_dim)
        self._out_pad = out_pad

        if expand_dim > 0:
            exp_pad = _lane_pad(expand_dim)
            self._exp_pad = exp_pad
            # Reference (PyTorch-layout) fp32 parameters.
            self.w_new, self.b_new = _linear_init(k1, k2, input_dim, expand_dim)
            self.w_fc, self.b_fc = _linear_init(k3, k4, expand_dim, output_dim)
            # Kernel layout: pre-transposed, zero-padded to lane-dense widths.
            w1 = jnp.zeros((input_dim, exp_pad), jnp.float32)
            w1 = w1.at[:, :expand_dim].set(self.w_new.T)
            b1 = jnp.zeros((1, exp_pad), jnp.float32).at[:, :expand_dim].set(self.b_new)
            w2 = jnp.zeros((exp_pad, out_pad), jnp.float32)
            w2 = w2.at[:expand_dim, :output_dim].set(self.w_fc.T)
            b2 = jnp.zeros((1, out_pad), jnp.float32).at[:, :output_dim].set(self.b_fc)
            self._w1 = w1.astype(mm_dtype)
            self._b1 = b1                      # biases stay fp32
            self._w2 = w2.astype(mm_dtype)
            self._b2 = b2
        else:
            self.w_fc, self.b_fc = _linear_init(k1, k2, input_dim, output_dim)
            w = jnp.zeros((input_dim, out_pad), jnp.float32)
            w = w.at[:, :output_dim].set(self.w_fc.T)
            b = jnp.zeros((1, out_pad), jnp.float32).at[:, :output_dim].set(self.b_fc)
            self._w = w.astype(mm_dtype)
            self._b = b
        # stddev only tags the layer in the reference module; no forward effect.

    # ---- helpers ----

    @staticmethod
    def _const_spec(shape, index_map, constant):
        if constant:
            # Never-changing block: single VMEM buffer, no double buffering.
            return pl.BlockSpec(shape, index_map, pipeline_mode=pl.Buffered(1))
        return pl.BlockSpec(shape, index_map)

    def __call__(self, x):
        B, in_dim = x.shape
        assert in_dim == self.input_dim
        if not self.use_bf16 and x.dtype != jnp.float32:
            x = x.astype(jnp.float32)   # keep the "exact fp32" mode honest
        out_pad = self._out_pad
        out_dtype = x.dtype
        x_item = x.dtype.itemsize
        out_item = jnp.dtype(out_dtype).itemsize
        w_item = 2 if self.use_bf16 else 4

        # ---- per-generation VMEM budgeting ----
        cap = _vmem_capacity_bytes()
        budget = int(cap * 0.75)
        vmem_limit = int(cap * 0.85)

        row_align = 16 if self.use_bf16 else 8   # bf16 packs 16 rows / vreg
        B_align = _round_up(B, row_align)
        tb_cands = [t for t in (1024, 512, 384, 256, 128, 64, 32, 16, 8)
                    if t % row_align == 0 and t <= B_align]
        if not tb_cands:
            tb_cands = [B_align]

        cparams_kw = dict(vmem_limit_bytes=vmem_limit)

        if self.expand_dim > 0:
            exp_pad = self._exp_pad

            def fp(tb, te, n_exp):
                wbufs = 1 if n_exp == 1 else 2           # Buffered(1) when resident
                stream = 2 * tb * (in_dim * x_item + out_pad * out_item)
                weights = (wbufs * ((in_dim + out_pad) * te * w_item + te * 4)
                           + out_pad * 4)
                scratch = tb * out_pad * 4               # fp32 accumulator
                temps = tb * te * (4 + w_item) + tb * in_dim * w_item
                return stream + weights + scratch + temps + (1 << 20)

            te_divs = [d for d in range(exp_pad, 0, -128) if exp_pad % d == 0]
            if self.max_exp_tile is not None:
                capped = [d for d in te_divs if d <= self.max_exp_tile]
                te_divs = capped or [te_divs[-1]]

            tb = te = None
            # Stage 1: keep the whole expand dim (and both weights) resident.
            if te_divs[0] == exp_pad:
                for cand in tb_cands:
                    if fp(cand, exp_pad, 1) <= budget:
                        if cand >= min(256, tb_cands[0]):
                            tb, te = cand, exp_pad
                        break
            # Stage 2: tile the expand (reduction) dim, prefer the largest batch tile.
            if tb is None:
                for cand in tb_cands:
                    d_fit = next((d for d in te_divs
                                  if fp(cand, d, exp_pad // d) <= budget), None)
                    if d_fit is not None:
                        tb, te = cand, d_fit
                        break
            if tb is None:
                # TODO(synk): also tile in_dim / out_pad for truly enormous layers.
                tb, te = tb_cands[-1], te_divs[-1]

            # Guarantee >=2 batch grid steps when possible (v7x megacore + overlap).
            if tb >= B_align and B_align >= 2 * row_align:
                tb = _round_up(_cdiv(B_align, 2), row_align)

            n_exp = exp_pad // te
            resident = (n_exp == 1)
            B_pad = _round_up(B, tb)
            nb = B_pad // tb
            if B_pad != B:
                # TODO(synk): mask the ragged tail in-kernel instead of this HBM pad copy.
                x_in = jnp.pad(x, ((0, B_pad - B), (0, 0)))
            else:
                x_in = x

            flops = 2 * B_pad * (in_dim * exp_pad + exp_pad * out_pad)
            w_bytes = (in_dim + out_pad) * exp_pad * w_item + (exp_pad + out_pad) * 4
            bytes_accessed = (B_pad * in_dim * x_item
                              + (1 if resident else nb) * w_bytes
                              + B_pad * out_pad * out_item)

            kernel = functools.partial(_fc_expand_kernel, cast_bf16=self.use_bf16)
            out_p = pl.pallas_call(
                kernel,
                out_shape=jax.ShapeDtypeStruct((B_pad, out_pad), out_dtype),
                grid=(nb, n_exp),
                in_specs=[
                    pl.BlockSpec((tb, in_dim), lambda i, j: (i, 0)),            # x tile
                    self._const_spec((in_dim, te), lambda i, j: (0, j), resident),  # W1
                    self._const_spec((1, te), lambda i, j: (0, j), resident),       # b1
                    self._const_spec((te, out_pad), lambda i, j: (j, 0), resident), # W2
                    self._const_spec((1, out_pad), lambda i, j: (0, 0), True),      # b2
                ],
                out_specs=pl.BlockSpec((tb, out_pad), lambda i, j: (i, 0)),
                scratch_shapes=[pltpu.VMEM((tb, out_pad), jnp.float32)],
                compiler_params=pltpu.CompilerParams(
                    dimension_semantics=("parallel", "arbitrary"), **cparams_kw),
                cost_estimate=pl.CostEstimate(
                    flops=int(flops), transcendentals=0,
                    bytes_accessed=int(bytes_accessed)),
            )(x_in, self._w1, self._b1, self._w2, self._b2)
        else:
            def fp(tb):
                stream = 2 * tb * (in_dim * x_item + out_pad * out_item)
                weights = in_dim * out_pad * w_item + out_pad * 4   # Buffered(1)
                temps = tb * in_dim * w_item + tb * out_pad * 4
                return stream + weights + temps + (1 << 20)

            tb = next((c for c in tb_cands if fp(c) <= budget), tb_cands[-1])
            # TODO(synk): if W alone exceeds the budget (huge input_dim*output_dim),
            # add a K/N tiling grid axis instead of relying on vmem_limit headroom.
            if tb >= B_align and B_align >= 2 * row_align:
                tb = _round_up(_cdiv(B_align, 2), row_align)
            B_pad = _round_up(B, tb)
            nb = B_pad // tb
            x_in = jnp.pad(x, ((0, B_pad - B), (0, 0))) if B_pad != B else x

            flops = 2 * B_pad * in_dim * out_pad
            bytes_accessed = (B_pad * in_dim * x_item
                              + in_dim * out_pad * w_item + out_pad * 4
                              + B_pad * out_pad * out_item)

            kernel = functools.partial(_fc_plain_kernel, cast_bf16=self.use_bf16)
            out_p = pl.pallas_call(
                kernel,
                out_shape=jax.ShapeDtypeStruct((B_pad, out_pad), out_dtype),
                grid=(nb,),
                in_specs=[
                    pl.BlockSpec((tb, in_dim), lambda i: (i, 0)),               # x tile
                    self._const_spec((in_dim, out_pad), lambda i: (0, 0), True),  # W
                    self._const_spec((1, out_pad), lambda i: (0, 0), True),       # b
                ],
                out_specs=pl.BlockSpec((tb, out_pad), lambda i: (i, 0)),
                compiler_params=pltpu.CompilerParams(
                    dimension_semantics=("parallel",), **cparams_kw),
                cost_estimate=pl.CostEstimate(
                    flops=int(flops), transcendentals=0,
                    bytes_accessed=int(bytes_accessed)),
            )(x_in, self._w, self._b)

        return out_p[:B, :self.output_dim]


# ---------------- reference (pure JAX) for sanity check ----------------

def _ref_forward(module: FCPallas, x):
    if module.expand_dim > 0:
        h = x @ module.w_new.T + module.b_new
        h = jnp.maximum(h, 0.0)
        return h @ module.w_fc.T + module.b_fc
    return x @ module.w_fc.T + module.b_fc


if __name__ == "__main__":
    key = jax.random.PRNGKey(0)
    kx, kp1, kp2, kp3, kp4 = jax.random.split(key, 5)

    batch, input_dim, expand_dim, output_dim = 8, 32, 64, 16
    x = jax.random.normal(kx, (batch, input_dim), jnp.float32)

    # Case 1: expand path (Linear -> ReLU -> Linear), exact fp32 mode.
    fc_fp32 = FCPallas(input_dim, output_dim, expand_dim, stddev=0.01, key=kp1,
                       use_bf16=False)
    y1 = fc_fp32(x)
    jax.block_until_ready(y1)
    r1 = _ref_forward(fc_fp32, x)
    assert y1.shape == (batch, output_dim)
    assert jnp.allclose(y1, r1, atol=1e-5, rtol=1e-5)

    # Case 2: expand path, default bf16 perf mode (fp32 accumulate), loose tol.
    fc_bf16 = FCPallas(input_dim, output_dim, expand_dim, key=kp2)
    y2 = fc_bf16(x)
    jax.block_until_ready(y2)
    r2 = _ref_forward(fc_bf16, x)
    assert y2.shape == (batch, output_dim)
    assert jnp.allclose(y2, r2, atol=5e-2, rtol=5e-2)

    # Case 3: plain Linear (expand_dim == 0), exact fp32 mode.
    fc_plain = FCPallas(input_dim, output_dim, 0, key=kp3, use_bf16=False)
    y3 = fc_plain(x)
    jax.block_until_ready(y3)
    r3 = _ref_forward(fc_plain, x)
    assert y3.shape == (batch, output_dim)
    assert jnp.allclose(y3, r3, atol=1e-5, rtol=1e-5)

    # Case 4: ragged batch + forced expand-dim tiling, to exercise the padding
    # path and the fp32-accumulator reduction grid axis.
    xr = jax.random.normal(kx, (10, input_dim), jnp.float32)
    fc_tiled = FCPallas(input_dim, output_dim, 256, key=kp4, use_bf16=False,
                        max_exp_tile=128)
    y4 = fc_tiled(xr)
    jax.block_until_ready(y4)
    r4 = _ref_forward(fc_tiled, xr)
    assert y4.shape == (10, output_dim)
    assert jnp.allclose(y4, r4, atol=1e-5, rtol=1e-5)

    print("KERNEL_OK")
</pallas_src>

<mosaic_0001>
module attributes {stable_mosaic.version = 11 : i64} {
  func.func @_fc_expand_kernel(%arg0: i32, %arg1: i32, %arg2: memref<8x32xf32, #tpu.memory_space<vmem>>, %arg3: memref<32x128xf32, #tpu.memory_space<vmem>>, %arg4: memref<1x128xf32, #tpu.memory_space<vmem>>, %arg5: memref<128x128xf32, #tpu.memory_space<vmem>>, %arg6: memref<1x128xf32, #tpu.memory_space<vmem>>, %arg7: memref<8x128xf32, #tpu.memory_space<vmem>>, %arg8: memref<8x128xf32, #tpu.memory_space<vmem>>) attributes {dimension_semantics = [#tpu.dimension_semantics<parallel>, #tpu.dimension_semantics<arbitrary>], iteration_bounds = array<i64: 1, 1>, scalar_prefetch = 0 : i64, scratch_operands = 1 : i64, tpu.core_type = #tpu.core_type<tc>, window_params = [{transform_indices = @transform_0, window_bounds = array<i64: 8, 32>}, {pipeline_mode = #tpu.pipeline_mode<synchronous>, transform_indices = @transform_1, window_bounds = array<i64: 32, 128>}, {pipeline_mode = #tpu.pipeline_mode<synchronous>, transform_indices = @transform_2, window_bounds = array<i64: 1, 128>}, {pipeline_mode = #tpu.pipeline_mode<synchronous>, transform_indices = @transform_3, window_bounds = array<i64: 128, 128>}, {pipeline_mode = #tpu.pipeline_mode<synchronous>, transform_indices = @transform_4, window_bounds = array<i64: 1, 128>}, {transform_indices = @transform_5, window_bounds = array<i64: 8, 128>}]} {
    %c0_i32 = arith.constant 0 : i32
    %0 = arith.cmpi eq, %arg1, %c0_i32 : i32
    %1 = arith.extui %0 : i1 to i32
    %c0_i32_0 = arith.constant 0 : i32
    %2 = arith.cmpi ne, %1, %c0_i32_0 : i32
    scf.if %2 {
      %cst_16 = arith.constant 0.000000e+00 : f32
      %19 = vector.broadcast %cst_16 : f32 to vector<8x128xf32>
      %c0_17 = arith.constant 0 : index
      %c0_18 = arith.constant 0 : index
      %20 = vector.load %arg8[%c0_17, %c0_18] : memref<8x128xf32, #tpu.memory_space<vmem>>, vector<8x128xf32>
      tpu.vector_store %arg8[%c0_17, %c0_18], %19 {strides = array<i32>} : memref<8x128xf32, #tpu.memory_space<vmem>>, vector<8x128xf32>,
    } else {
    }
    %c0 = arith.constant 0 : index
    %c0_1 = arith.constant 0 : index
    %3 = vector.load %arg2[%c0, %c0_1] : memref<8x32xf32, #tpu.memory_space<vmem>>, vector<8x32xf32>
    %c0_2 = arith.constant 0 : index
    %c0_3 = arith.constant 0 : index
    %4 = vector.load %arg3[%c0_2, %c0_3] : memref<32x128xf32, #tpu.memory_space<vmem>>, vector<32x128xf32>
    %cst = arith.constant dense<0.000000e+00> : vector<8x128xf32>
    %5 = tpu.matmul %3, %4, %cst {dimension_numbers = #tpu.dot_dimension_numbers<[1], [0], [0], [1], [0, 0, 1, 1], [], []>} : vector<8x32xf32>, vector<32x128xf32>, vector<8x128xf32> -> vector<8x128xf32>
    %c0_4 = arith.constant 0 : index
    %c0_5 = arith.constant 0 : index
    %6 = vector.load %arg4[%c0_4, %c0_5] : memref<1x128xf32, #tpu.memory_space<vmem>>, vector<1x128xf32>
    %7 = vector.broadcast %6 : vector<1x128xf32> to vector<8x128xf32>
    %8 = arith.addf %5, %7 : vector<8x128xf32>
    %cst_6 = arith.constant 0.000000e+00 : f32
    %9 = vector.broadcast %cst_6 : f32 to vector<8x128xf32>
    %10 = arith.maximumf %8, %9 : vector<8x128xf32>
    %c0_7 = arith.constant 0 : index
    %c0_8 = arith.constant 0 : index
    %11 = vector.load %arg8[%c0_7, %c0_8] : memref<8x128xf32, #tpu.memory_space<vmem>>, vector<8x128xf32>
    %c0_9 = arith.constant 0 : index
    %c0_10 = arith.constant 0 : index
    %12 = vector.load %arg5[%c0_9, %c0_10] : memref<128x128xf32, #tpu.memory_space<vmem>>, vector<128x128xf32>
    %cst_11 = arith.constant dense<0.000000e+00> : vector<8x128xf32>
    %13 = tpu.matmul %10, %12, %cst_11 {dimension_numbers = #tpu.dot_dimension_numbers<[1], [0], [0], [1], [0, 0, 1, 1], [], []>} : vector<8x128xf32>, vector<128x128xf32>, vector<8x128xf32> -> vector<8x128xf32>
    %14 = arith.addf %11, %13 : vector<8x128xf32>
    %c0_12 = arith.constant 0 : index
    %c0_13 = arith.constant 0 : index
    %15 = vector.load %arg8[%c0_12, %c0_13] : memref<8x128xf32, #tpu.memory_space<vmem>>, vector<8x128xf32>
    tpu.vector_store %arg8[%c0_12, %c0_13], %14 {strides = array<i32>} : memref<8x128xf32, #tpu.memory_space<vmem>>, vector<8x128xf32>,
    %c0_i32_14 = arith.constant 0 : i32
    %16 = arith.cmpi eq, %arg1, %c0_i32_14 : i32
    %17 = arith.extui %16 : i1 to i32
    %c0_i32_15 = arith.constant 0 : i32
    %18 = arith.cmpi ne, %17, %c0_i32_15 : i32
    scf.if %18 {
      %c0_16 = arith.constant 0 : index
      %c0_17 = arith.constant 0 : index
      %19 = vector.load %arg8[%c0_16, %c0_17] : memref<8x128xf32, #tpu.memory_space<vmem>>, vector<8x128xf32>
      %c0_18 = arith.constant 0 : index
      %c0_19 = arith.constant 0 : index
      %20 = vector.load %arg6[%c0_18, %c0_19] : memref<1x128xf32, #tpu.memory_space<vmem>>, vector<1x128xf32>
      %21 = vector.broadcast %20 : vector<1x128xf32> to vector<8x128xf32>
      %22 = arith.addf %19, %21 : vector<8x128xf32>
      %c0_20 = arith.constant 0 : index
      %c0_21 = arith.constant 0 : index
      %23 = vector.load %arg7[%c0_20, %c0_21] : memref<8x128xf32, #tpu.memory_space<vmem>>, vector<8x128xf32>
      tpu.vector_store %arg7[%c0_20, %c0_21], %22 {strides = array<i32>} : memref<8x128xf32, #tpu.memory_space<vmem>>, vector<8x128xf32>,
    } else {
    }
    return
  }
  func.func @transform_0(%arg0: i32, %arg1: i32) -> (i32, i32) {
    %c0_i32 = arith.constant 0 : i32
    %c0_i32_0 = arith.constant 0 : i32
    return %arg0, %c0_i32 : i32, i32
  }
  func.func @transform_1(%arg0: i32, %arg1: i32) -> (i32, i32) {
    %c0_i32 = arith.constant 0 : i32
    %c0_i32_0 = arith.constant 0 : i32
    return %c0_i32, %arg1 : i32, i32
  }
  func.func @transform_2(%arg0: i32, %arg1: i32) -> (i32, i32) {
    %c0_i32 = arith.constant 0 : i32
    %c0_i32_0 = arith.constant 0 : i32
    return %c0_i32, %arg1 : i32, i32
  }
  func.func @transform_3(%arg0: i32, %arg1: i32) -> (i32, i32) {
    %c0_i32 = arith.constant 0 : i32
    %c0_i32_0 = arith.constant 0 : i32
    return %arg1, %c0_i32 : i32, i32
  }
  func.func @transform_4(%arg0: i32, %arg1: i32) -> (i32, i32) {
    %c0_i32 = arith.constant 0 : i32
    %c0_i32_0 = arith.constant 0 : i32
    %c0_i32_1 = arith.constant 0 : i32
    return %c0_i32, %c0_i32_0 : i32, i32
  }
  func.func @transform_5(%arg0: i32, %arg1: i32) -> (i32, i32) {
    %c0_i32 = arith.constant 0 : i32
    %c0_i32_0 = arith.constant 0 : i32
    return %arg0, %c0_i32 : i32, i32
  }
}

</mosaic_0001>

<llo_original>
// kernel: tpu_custom_call.1
$region0: #{tpu_custom_call.1}
  #allocation0 [shape = 'u32[]', space=smem, size = 0x4, offset = 0x4, fixed_abs, tag = 'smem constant byte address 0x4 - core index']
  #allocation1 [shape = 'u32[144,128]{1,0:T(1,128)}', space=vmem, size = 0x12000, scoped, tag = 'internal scratch']
  #allocation2 [shape = 'f32[8,128]{1,0:T(8,128)}', space=vmem, size = 0x1000, scoped, tag = 'scratch operand']
  %s0 = inlined_call_operand.hbm [shape: f32[8,32], index: 0, kind: input, shape index: {}]
  %s1 = inlined_call_operand.hbm [shape: f32[32,128], index: 1, kind: input, shape index: {}]
  %s2 = inlined_call_operand.vmem [shape: f32[1,128], index: 2, kind: input, shape index: {}]
  %s3 = inlined_call_operand.hbm [shape: f32[128,128], index: 3, kind: input, shape index: {}]
  %s4 = inlined_call_operand.vmem [shape: f32[1,128], index: 4, kind: input, shape index: {}]
  %s5 = inlined_call_operand.hbm [shape: f32[8,128], index: 5, kind: output, shape index: {}]
  %s6 = sld [smem:[#allocation0]]
  $region50: #{tpu_custom_call.1} parent=0
    _
  %s8 = ssub.s32 1, %s6
  %s9 = scalar_select 0, %s8, %s6
  $region1: #{tpu_custom_call.1} parent=0
    #allocation3 [shape = 'u8[4096]{0}', space=vmem, size = 0x1000, scoped, tag = 'input window, operand 0, single buffered']
    #allocation4 [shape = 's32[1]{0}', space=sflag, size = 0x4, scoped, tag = 'scoped memory for tpu_custom_call.1']
    #allocation5 [shape = 's32[1]{0}', space=sflag, size = 0x4, scoped, tag = 'scoped memory for tpu_custom_call.1']
    #allocation6 [shape = 'u8[16384]{0}', space=vmem, size = 0x4000, scoped, tag = 'input window, operand 1, single buffered']
    #allocation7 [shape = 's32[1]{0}', space=sflag, size = 0x4, scoped, tag = 'scoped memory for tpu_custom_call.1']
    #allocation8 [shape = 'u8[65536]{0}', space=vmem, size = 0x10000, scoped, tag = 'input window, operand 3, single buffered']
    #allocation9 [shape = 'u8[4096]{0}', space=vmem, size = 0x1000, scoped, tag = 'output window, operand 0, single buffered']
    %10 = vsyncpa [#allocation4], 0
    %11 = vsyncpa [#allocation7], 0
    %12 = vsyncpa [#allocation5], 0
    // Predicated region
    $region2: #{tpu_custom_call.1} parent=1 // pred_check
      _
    $region3: #{tpu_custom_call.1} parent=1 // pred_check_branch
      %14 = sbr.rel (0) target = $region5
    $region4: #{tpu_custom_call.1} parent=1 // pred_region
      %s16 = ssub.s32 128, 128
      %17 = vsyncadd [#allocation4], %s16
      %s19 = sshll.u32 [#allocation3], 4
      %s20 = int_to_ptr.vmem [resolvable:$true] %s19
      %22 = dma.hbm_to_vmem [thread:$0]  %s0, 128, %s20, [#allocation4]
    $region5: #{tpu_custom_call.1} parent=1 // pred_fallthru
      _
    // Predicated region
    $region6: #{tpu_custom_call.1} parent=1 // pred_check
      _
    $region7: #{tpu_custom_call.1} parent=1 // pred_check_branch
      %24 = sbr.rel (0) target = $region9
    $region8: #{tpu_custom_call.1} parent=1 // pred_region
      %s26 = ssub.s32 512, 512
      %27 = vsyncadd [#allocation7], %s26
      %s28 = sshll.u32 [#allocation6], 4
      %s29 = int_to_ptr.vmem [resolvable:$true] %s28
      %34 = dma.hbm_to_vmem [thread:$0]  %s1, 512, %s29, [#allocation7], 128, 128, 8
    $region9: #{tpu_custom_call.1} parent=1 // pred_fallthru
      _
    // Predicated region
    $region10: #{tpu_custom_call.1} parent=1 // pred_check
      _
    $region11: #{tpu_custom_call.1} parent=1 // pred_check_branch
      %36 = sbr.rel (0) target = $region13
    $region12: #{tpu_custom_call.1} parent=1 // pred_region
      _
    $region13: #{tpu_custom_call.1} parent=1 // pred_fallthru
      _
    // Predicated region
    $region14: #{tpu_custom_call.1} parent=1 // pred_check
      _
    $region15: #{tpu_custom_call.1} parent=1 // pred_check_branch
      %38 = sbr.rel (0) target = $region17
    $region16: #{tpu_custom_call.1} parent=1 // pred_region
      %s40 = ssub.s32 2048, 2048
      %41 = vsyncadd [#allocation7], %s40
      %s42 = sshll.u32 [#allocation8], 4
      %s43 = int_to_ptr.vmem [resolvable:$true] %s42
      %48 = dma.hbm_to_vmem [thread:$0]  %s3, 2048, %s43, [#allocation7], 128, 128, 8
    $region17: #{tpu_custom_call.1} parent=1 // pred_fallthru
      _
    // Predicated region
    $region18: #{tpu_custom_call.1} parent=1 // pred_check
      _
    $region19: #{tpu_custom_call.1} parent=1 // pred_check_branch
      %50 = sbr.rel (0) target = $region21
    $region20: #{tpu_custom_call.1} parent=1 // pred_region
      _
    $region21: #{tpu_custom_call.1} parent=1 // pred_fallthru
      _
    // Predicated region
    $region22: #{tpu_custom_call.1} parent=1 // pred_check
      _
    $region23: #{tpu_custom_call.1} parent=1 // pred_check_branch
      %52 = sbr.rel (0) target = $region25
    $region24: #{tpu_custom_call.1} parent=1 // pred_region
      %53 = dma.done [#allocation4], 128
    $region25: #{tpu_custom_call.1} parent=1 // pred_fallthru
      _
    // Predicated region
    $region26: #{tpu_custom_call.1} parent=1 // pred_check
      _
    $region27: #{tpu_custom_call.1} parent=1 // pred_check_branch
      %55 = sbr.rel (0) target = $region29
    $region28: #{tpu_custom_call.1} parent=1 // pred_region
      %56 = dma.done [#allocation7], 512
    $region29: #{tpu_custom_call.1} parent=1 // pred_fallthru
      _
    // Predicated region
    $region30: #{tpu_custom_call.1} parent=1 // pred_check
      _
    $region31: #{tpu_custom_call.1} parent=1 // pred_check_branch
      %58 = sbr.rel (0) target = $region33
    $region32: #{tpu_custom_call.1} parent=1 // pred_region
      %59 = dma.done [#allocation7], 2048
    $region33: #{tpu_custom_call.1} parent=1 // pred_fallthru
      _
    %p60 = scmp.eq.s32.totalorder 0, 0
    // Predicated region
    $region34: #{tpu_custom_call.1} parent=1 // pred_check
      %p61 = pneg %p60
    $region35: #{tpu_custom_call.1} parent=1 // pred_check_branch
      %63 = sbr.rel (%p61) target = $region37
    $region36: #{tpu_custom_call.1} parent=1 // pred_region
      %64 = vst [vmem:[#allocation2] sm:$0xff] 0.0
    $region37: #{tpu_custom_call.1} parent=1 // pred_fallthru
      _
    %v65 = vld [vmem:[#allocation3] sm:$0xff]
    %v66 = vld [vmem:[#allocation6] sm:$0xff]
    %v67 = vld [vmem:[#allocation6 + $0x8] sm:$0xff]
    %v68 = vld [vmem:[#allocation6 + $0x10] sm:$0xff]
    %v69 = vld [vmem:[#allocation6 + $0x18] sm:$0xff]
    %v70 = vld [vmem:[%s2] sm:$0x1]
    %v72 = vlaneseq
    %v73 = vshrl.u32 %v72, 7
    %v74 = vsub.s32 0, %v73
    %v75 = vrot.slane %v70, %v74
    %vm77 = vcmask 261120
    %v79 = vsel %vm77, %v65, 0
    %81 = vmatprep.subr.mxu0 0.0
    %82 = vmatpush1.msra.mxu0 %v66
    %83 = vmatprep.subr.mxu0 0.0
    %84 = vmatpush1.msra.mxu0 %v67
    %85 = vmatprep.subr.mxu0 0.0
    %86 = vmatpush1.msra.mxu0 %v68
    %87 = vmatprep.subr.mxu0 0.0
    %88 = vmatpush1.msra.mxu0 %v69
    %89 = vmatprep.subr.mxu0 0.0
    %90 = vmatpush1.msra.mxu0 0.0
    %91 = vmatprep.subr.mxu0 0.0
    %92 = vmatpush1.msra.mxu0 0.0
    %93 = vmatprep.subr.mxu0 0.0
    %94 = vmatpush1.msra.mxu0 0.0
    %95 = vmatprep.subr.mxu0 0.0
    %96 = vmatpush1.msra.mxu0 0.0
    %97 = vmatprep.subr.mxu0 0.0
    %98 = vmatpush1.msra.mxu0 0.0
    %99 = vmatprep.subr.mxu0 0.0
    %100 = vmatpush1.msra.mxu0 0.0
    %101 = vmatprep.subr.mxu0 0.0
    %102 = vmatpush1.msra.mxu0 0.0
    %103 = vmatprep.subr.mxu0 0.0
    %104 = vmatpush1.msra.mxu0 0.0
    %105 = vmatprep.subr.mxu0 0.0
    %106 = vmatpush1.msra.mxu0 0.0
    %107 = vmatprep.subr.mxu0 0.0
    %108 = vmatpush1.msra.mxu0 0.0
    %109 = vmatprep.subr.mxu0 0.0
    %110 = vmatpush1.msra.mxu0 0.0
    %111 = vmatprep.subr.mxu0 0.0
    %112 = vmatpush1.msra.mxu0 0.0
    %113 = vmatprep.subr.mxu0 0.0
    %114 = vmatpush1.msra.mxu0 0.0
    %115 = vmatprep.subr.mxu0 0.0
    %116 = vmatpush1.msra.mxu0 0.0
    %117 = vmatprep.subr.mxu0 0.0
    %118 = vmatpush1.msra.mxu0 0.0
    %119 = vmatprep.subr.mxu0 0.0
    %120 = vmatpush1.msra.mxu0 0.0
    %121 = vmatprep.subr.mxu0 0.0
    %122 = vmatpush1.msra.mxu0 0.0
    %123 = vmatprep.subr.mxu0 0.0
    %124 = vmatpush1.msra.mxu0 0.0
    %125 = vmatprep.subr.mxu0 0.0
    %126 = vmatpush1.msra.mxu0 0.0
    %127 = vmatprep.subr.mxu0 0.0
    %128 = vmatpush1.msra.mxu0 0.0
    %129 = vmatprep.subr.mxu0 0.0
    %130 = vmatpush1.msra.mxu0 0.0
    %131 = vmatprep.subr.mxu0 0.0
    %132 = vmatpush1.msra.mxu0 0.0
    %133 = vmatprep.subr.mxu0 0.0
    %134 = vmatpush1.msra.mxu0 0.0
    %135 = vmatprep.subr.mxu0 0.0
    %136 = vmatpush1.msra.mxu0 0.0
    %137 = vmatprep.subr.mxu0 0.0
    %138 = vmatpush1.msra.mxu0 0.0
    %139 = vmatprep.subr.mxu0 0.0
    %140 = vmatpush1.msra.mxu0 0.0
    %141 = vmatprep.subr.mxu0 0.0
    %142 = vmatpush1.msra.mxu0 0.0
    %143 = vmatprep.subr.mxu0 0.0
    %144 = vmatpush1.msra.mxu0 0.0
    %145 = vmatprep.mubr.f32.mxu0 0.0
    %146 = vmatmul.mubr.f32.gmra.mrb[0].mxu0 %v79
    %v147 = vpop.f32.mrb[0].mxu0
    %v148 = vadd.f32 %v75, %v147
    %v149 = vpop.f32.mrb[0].mxu0
    %150 = vdwg.mxu0
    %v151 = vmax.f32 %v148, 0.0
    %v152 = vld [vmem:[#allocation2] sm:$0xff]
    %v153 = vld [vmem:[#allocation8] sm:$0xff]
    %v154 = vld [vmem:[#allocation8 + $0x8] sm:$0xff]
    %v155 = vld [vmem:[#allocation8 + $0x10] sm:$0xff]
    %v156 = vld [vmem:[#allocation8 + $0x18] sm:$0xff]
    %v157 = vld [vmem:[#allocation8 + $0x20] sm:$0xff]
    %v158 = vld [vmem:[#allocation8 + $0x28] sm:$0xff]
    %v159 = vld [vmem:[#allocation8 + $0x30] sm:$0xff]
    %v160 = vld [vmem:[#allocation8 + $0x38] sm:$0xff]
    %v161 = vld [vmem:[#allocation8 + $0x40] sm:$0xff]
    %v162 = vld [vmem:[#allocation8 + $0x48] sm:$0xff]
    %v163 = vld [vmem:[#allocation8 + $0x50] sm:$0xff]
    %v164 = vld [vmem:[#allocation8 + $0x58] sm:$0xff]
    %v165 = vld [vmem:[#allocation8 + $0x60] sm:$0xff]
    %v166 = vld [vmem:[#allocation8 + $0x68] sm:$0xff]
    %v167 = vld [vmem:[#allocation8 + $0x70] sm:$0xff]
    %v168 = vld [vmem:[#allocation8 + $0x78] sm:$0xff]
    %169 = vmatprep.subr.mxu0 0.0
    %170 = vmatpush1.msra.mxu0 %v153
    %171 = vmatprep.subr.mxu0 0.0
    %172 = vmatpush1.msra.mxu0 %v154
    %173 = vmatprep.subr.mxu0 0.0
    %174 = vmatpush1.msra.mxu0 %v155
    %175 = vmatprep.subr.mxu0 0.0
    %176 = vmatpush1.msra.mxu0 %v156
    %177 = vmatprep.subr.mxu0 0.0
    %178 = vmatpush1.msra.mxu0 %v157
    %179 = vmatprep.subr.mxu0 0.0
    %180 = vmatpush1.msra.mxu0 %v158
    %181 = vmatprep.subr.mxu0 0.0
    %182 = vmatpush1.msra.mxu0 %v159
    %183 = vmatprep.subr.mxu0 0.0
    %184 = vmatpush1.msra.mxu0 %v160
    %185 = vmatprep.subr.mxu0 0.0
    %186 = vmatpush1.msra.mxu0 %v161
    %187 = vmatprep.subr.mxu0 0.0
    %188 = vmatpush1.msra.mxu0 %v162
    %189 = vmatprep.subr.mxu0 0.0
    %190 = vmatpush1.msra.mxu0 %v163
    %191 = vmatprep.subr.mxu0 0.0
    %192 = vmatpush1.msra.mxu0 %v164
    %193 = vmatprep.subr.mxu0 0.0
    %194 = vmatpush1.msra.mxu0 %v165
    %195 = vmatprep.subr.mxu0 0.0
    %196 = vmatpush1.msra.mxu0 %v166
    %197 = vmatprep.subr.mxu0 0.0
    %198 = vmatpush1.msra.mxu0 %v167
    %199 = vmatprep.subr.mxu0 0.0
    %200 = vmatpush1.msra.mxu0 %v168
    %201 = vmatprep.subr.mxu0 0.0
    %202 = vmatpush1.msra.mxu0 0.0
    %203 = vmatprep.subr.mxu0 0.0
    %204 = vmatpush1.msra.mxu0 0.0
    %205 = vmatprep.subr.mxu0 0.0
    %206 = vmatpush1.msra.mxu0 0.0
    %207 = vmatprep.subr.mxu0 0.0
    %208 = vmatpush1.msra.mxu0 0.0
    %209 = vmatprep.subr.mxu0 0.0
    %210 = vmatpush1.msra.mxu0 0.0
    %211 = vmatprep.subr.mxu0 0.0
    %212 = vmatpush1.msra.mxu0 0.0
    %213 = vmatprep.subr.mxu0 0.0
    %214 = vmatpush1.msra.mxu0 0.0
    %215 = vmatprep.subr.mxu0 0.0
    %216 = vmatpush1.msra.mxu0 0.0
    %217 = vmatprep.subr.mxu0 0.0
    %218 = vmatpush1.msra.mxu0 0.0
    %219 = vmatprep.subr.mxu0 0.0
    %220 = vmatpush1.msra.mxu0 0.0
    %221 = vmatprep.subr.mxu0 0.0
    %222 = vmatpush1.msra.mxu0 0.0
    %223 = vmatprep.subr.mxu0 0.0
    %224 = vmatpush1.msra.mxu0 0.0
    %225 = vmatprep.subr.mxu0 0.0
    %226 = vmatpush1.msra.mxu0 0.0
    %227 = vmatprep.subr.mxu0 0.0
    %228 = vmatpush1.msra.mxu0 0.0
    %229 = vmatprep.subr.mxu0 0.0
    %230 = vmatpush1.msra.mxu0 0.0
    %231 = vmatprep.subr.mxu0 0.0
    %232 = vmatpush1.msra.mxu0 0.0
    %233 = vmatprep.mubr.f32.mxu0 0.0
    %234 = vmatmul.mubr.f32.gmra.mrb[0].mxu0 %v151
    %v235 = vpop.f32.mrb[0].mxu0
    %v236 = vadd.f32 0.0, %v235
    %v237 = vpop.f32.mrb[0].mxu0
    %238 = vdwg.mxu0
    %v239 = vadd.f32 %v152, %v236
    %240 = vst [vmem:[#allocation2] sm:$0xff] %v239
    // Predicated region
    $region38: #{tpu_custom_call.1} parent=1 // pred_check
      %p241 = pneg %p60
    $region39: #{tpu_custom_call.1} parent=1 // pred_check_branch
      %243 = sbr.rel (%p241) target = $region41
    $region40: #{tpu_custom_call.1} parent=1 // pred_region
      %v244 = vld [vmem:[#allocation2] sm:$0xff]
      %v245 = vld [vmem:[%s4] sm:$0x1]
      %v247 = vlaneseq
      %v248 = vshrl.u32 %v247, 7
      %v249 = vsub.s32 0, %v248
      %v250 = vrot.slane %v245, %v249
      %v252 = vadd.f32 %v244, %v250
      %253 = vst [vmem:[#allocation9] sm:$0xff] %v252
    $region41: #{tpu_custom_call.1} parent=1 // pred_fallthru
      _
    // Predicated region
    $region42: #{tpu_custom_call.1} parent=1 // pred_check
      _
    $region43: #{tpu_custom_call.1} parent=1 // pred_check_branch
      %255 = sbr.rel (0) target = $region45
    $region44: #{tpu_custom_call.1} parent=1 // pred_region
      %s257 = ssub.s32 128, 128
      %258 = vsyncadd [#allocation5], %s257
      %s260 = sshll.u32 [#allocation9], 4
      %s261 = int_to_ptr.vmem [resolvable:$true] %s260
      %263 = dma.vmem_to_hbm [thread:$0]  %s261, 128, %s5, [#allocation5]
    $region45: #{tpu_custom_call.1} parent=1 // pred_fallthru
      _
    // Predicated region
    $region46: #{tpu_custom_call.1} parent=1 // pred_check
      _
    $region47: #{tpu_custom_call.1} parent=1 // pred_check_branch
      %265 = sbr.rel (0) target = $region49
    $region48: #{tpu_custom_call.1} parent=1 // pred_region
      %266 = dma.done [#allocation5], 128
    $region49: #{tpu_custom_call.1} parent=1 // pred_fallthru
      _
    %267 = vsyncpa [#allocation4], 1
    %268 = vsyncpa [#allocation7], 1
    %269 = vsyncpa [#allocation5], 1

</llo_original>
